<compile_context>
chip_gen: v7x
topology: tpu7x:2x2x1
jax: 0.10.0
libtpu: 0.0.40
codegen_flags: <defaults>
</compile_context>

<pallas_src>
import functools
import math

import jax
import jax.numpy as jnp
from jax import lax
from jax.experimental import pallas as pl
from jax.experimental.pallas import tpu as pltpu


def _odconv1d_kernel(L, C_in, K, Kn, P, L_out,
                     x_ref,      # (L, C_in)        f32, unpadded NLC tile
                     csp_ref,    # (1, K*C_in)      f32, sp[k]*ch[c] per column
                     fil_ref,    # (C_out, 1)       f32, filter attention
                     ka_ref,     # (1, Kn)          f32, kernel attention
                     w_ref,      # (Kn, C_out, K*C_in) bf16, static weights
                     out_ref,    # (C_out, L_out)   f32, NCL output tile
                     xp_ref):    # (L+2P, C_in)     f32 VMEM scratch (padded x)
    f32 = jnp.float32
    bf16 = jnp.bfloat16

    # ---- dynamic weight: aggregate over kernel_num with scalar-splat FMAs,
    #      then fold channel + spatial attention in as ONE per-column scale. --
    ka = ka_ref[...]                                    # (1, Kn)
    agg = ka[:, 0:1] * w_ref[0]                         # bf16 -> f32 promote
    for n in range(1, Kn):
        agg = agg + ka[:, n:n + 1] * w_ref[n]           # (C_out, K*C_in) f32
    agg = agg * csp_ref[...]                            # csp[0, k*C_in+c]

    # ---- in-kernel zero padding: x arrives from HBM unpadded (read once);
    #      the pad rows only ever exist in this VMEM scratch. -----------------
    if P > 0:
        xp_ref[0:P, :] = jnp.zeros((P, C_in), f32)
        xp_ref[P + L:L + 2 * P, :] = jnp.zeros((P, C_in), f32)
        xp_ref[P:P + L, :] = x_ref[...]
        xp = xp_ref[...]                                # (L+2P, C_in)
    else:
        xp = x_ref[...]

    # ---- conv as K MXU matmuls in NT form (contract on the last dim of both
    #      operands), bf16 operands, f32 accumulation.  The result is produced
    #      directly in NCL (C_out, L_out): lane-dense store along L_out, no
    #      wrapper-side transpose pass over the output. -----------------------
    nt = (((1,), (1,)), ((), ()))
    acc = None
    for k in range(K):
        w_k = agg[:, k * C_in:(k + 1) * C_in].astype(bf16)     # (C_out, C_in)
        x_k = xp[k:k + L_out, :].astype(bf16)                  # (L_out, C_in)
        part = lax.dot_general(w_k, x_k, nt, preferred_element_type=f32)
        acc = part if acc is None else acc + part              # (C_out, L_out)

    # filter attention on the output channels, then store.
    out_ref[...] = (acc * fil_ref[...]).astype(out_ref.dtype)


def odconv1d(x, p, *, stride=1, padding=1, dilation=1, groups=1,
             temperature=1.0):
    """x: (B, L, in_planes) float32.  Returns (B, out_planes, L_out) (NCL)."""
    assert stride == 1 and dilation == 1 and groups == 1  # TODO(synk): general
    f32 = jnp.float32
    B, L, C_in = x.shape
    weight = p["weight"].astype(f32)                    # (Kn, C_out, C_in, K)
    Kn, C_out, _, K = weight.shape
    P = padding
    L_out = L + 2 * P - K + 1
    T = float(temperature)
    x = x.astype(f32)

    # ---- OD_Attention, hoisted into ONE batched XLA pass (eval-mode BN). ----
    # (Costs one extra HBM read of x for the pooled mean; in exchange the
    #  serial attention chain leaves the per-grid-step critical path.)
    pooled = jnp.mean(x, axis=1)                                     # (B, C_in)
    z = pooled @ p["fc_w"][:, :, 0].astype(f32).T                    # (B, A)
    z = ((z - p["bn_mean"].astype(f32))
         * lax.rsqrt(p["bn_var"].astype(f32) + p["bn_eps"])
         * p["bn_gamma"].astype(f32) + p["bn_beta"].astype(f32))
    h = jnp.maximum(z, 0.0)

    def head(wn, bn):
        return (h @ p[wn][:, :, 0].astype(f32).T + p[bn].astype(f32)) / T

    ch = jax.nn.sigmoid(head("channel_w", "channel_b"))              # (B, C_in)
    fil = jax.nn.sigmoid(head("filter_w", "filter_b"))               # (B, C_out)
    sp = jax.nn.sigmoid(head("spatial_w", "spatial_b"))              # (B, K)
    ka = jax.nn.softmax(head("kernel_w", "kernel_b"), axis=-1)       # (B, Kn)

    # channel + spatial attention as one per-column scale of the aggregated
    # weight: csp[b, 0, k*C_in + c] = sp[b, k] * ch[b, c].
    csp = (sp[:, :, None] * ch[:, None, :]).reshape(B, 1, K * C_in)
    fil_c = fil[:, :, None]                                          # (B,Co,1)
    ka_r = ka[:, None, :]                                            # (B,1,Kn)

    # static weight -> (Kn, C_out, K*C_in), column r = k*C_in + c; bf16 for MXU.
    w_r = jnp.transpose(weight, (0, 1, 3, 2)).reshape(Kn, C_out, K * C_in)
    w_r = w_r.astype(jnp.bfloat16)

    kernel = functools.partial(_odconv1d_kernel, L, C_in, K, Kn, P, L_out)

    return pl.pallas_call(
        kernel,
        out_shape=jax.ShapeDtypeStruct((B, C_out, L_out), f32),
        grid=(B,),
        in_specs=[
            pl.BlockSpec((pl.Squeezed(), L, C_in), lambda b: (b, 0, 0)),
            pl.BlockSpec((pl.Squeezed(), 1, K * C_in), lambda b: (b, 0, 0)),
            pl.BlockSpec((pl.Squeezed(), C_out, 1), lambda b: (b, 0, 0)),
            pl.BlockSpec((pl.Squeezed(), 1, Kn), lambda b: (b, 0, 0)),
            pl.BlockSpec((Kn, C_out, K * C_in), lambda b: (0, 0, 0)),
        ],
        out_specs=pl.BlockSpec((pl.Squeezed(), C_out, L_out),
                               lambda b: (b, 0, 0)),
        scratch_shapes=[pltpu.VMEM((L + 2 * P, C_in), f32)],
        compiler_params=pltpu.CompilerParams(
            dimension_semantics=("parallel",),
            vmem_limit_bytes=64 * 1024 * 1024),
    )(x, csp, fil_c, ka_r, w_r)


def reference_odconv1d(x, p, *, stride=1, padding=1, dilation=1, groups=1,
                       temperature=1.0):
    """Pure-JAX mirror of the PyTorch forward (eval-mode BatchNorm)."""
    del stride, dilation, groups
    B, L, C_in = x.shape
    weight = p["weight"].astype(jnp.float32)
    Kn, C_out, _, K = weight.shape
    P = padding
    L_out = L + 2 * P - K + 1
    T = float(temperature)
    f32 = jnp.float32

    pooled = jnp.mean(x.astype(f32), axis=1)                               # (B, C_in)
    z = pooled @ p["fc_w"][:, :, 0].astype(f32).T                          # (B, A)
    z = ((z - p["bn_mean"]) / jnp.sqrt(p["bn_var"] + p["bn_eps"])
         * p["bn_gamma"] + p["bn_beta"])
    h = jnp.maximum(z, 0.0)

    def sig(wn, bn):
        return jax.nn.sigmoid((h @ p[wn][:, :, 0].astype(f32).T + p[bn]) / T)

    ch = sig("channel_w", "channel_b")                                     # (B, C_in)
    fil = sig("filter_w", "filter_b")                                      # (B, C_out)
    sp = sig("spatial_w", "spatial_b")                                     # (B, K)
    kl = (h @ p["kernel_w"][:, :, 0].astype(f32).T + p["kernel_b"]) / T
    ka = jax.nn.softmax(kl, axis=1)                                        # (B, Kn)

    agg = jnp.einsum('bn,nock->bock', ka, weight) * sp[:, None, None, :]   # (B,Co,Ci,K)
    x_ncl = jnp.transpose(x.astype(f32), (0, 2, 1)) * ch[:, :, None]       # (B,Ci,L)
    x_p = jnp.pad(x_ncl, ((0, 0), (0, 0), (P, P)))
    win = jnp.stack([x_p[:, :, k:k + L_out] for k in range(K)], axis=-1)   # (B,Ci,Lo,K)
    out = jnp.einsum('bock,bctk->bot', agg, win)                           # (B,Co,Lo)
    return out * fil[:, :, None]


if __name__ == "__main__":
    B, L = 2, 16
    in_planes, out_planes = 4, 8
    kernel_size, kernel_num = 3, 4
    padding = 1
    reduction, min_channel = 0.0625, 16
    A = max(int(in_planes * reduction), min_channel)   # = 16

    key = jax.random.PRNGKey(0)
    ks = jax.random.split(key, 16)

    x = jax.random.normal(ks[0], (B, L, in_planes), jnp.float32)

    def conv_init(k, shape):
        fan_out = shape[0] * shape[2]
        std = math.sqrt(2.0 / fan_out)
        return std * jax.random.normal(k, shape, jnp.float32)

    p = {
        "fc_w": conv_init(ks[1], (A, in_planes, 1)),
        "bn_gamma": 1.0 + 0.1 * jax.random.normal(ks[2], (A,), jnp.float32),
        "bn_beta": 0.1 * jax.random.normal(ks[3], (A,), jnp.float32),
        "bn_mean": 0.1 * jax.random.normal(ks[4], (A,), jnp.float32),
        "bn_var": 1.0 + 0.2 * jax.random.uniform(ks[5], (A,), jnp.float32),
        "bn_eps": 1e-5,
        "channel_w": conv_init(ks[6], (in_planes, A, 1)),
        "channel_b": 0.1 * jax.random.normal(ks[7], (in_planes,), jnp.float32),
        "filter_w": conv_init(ks[8], (out_planes, A, 1)),
        "filter_b": 0.1 * jax.random.normal(ks[9], (out_planes,), jnp.float32),
        "spatial_w": conv_init(ks[10], (kernel_size, A, 1)),
        "spatial_b": 0.1 * jax.random.normal(ks[11], (kernel_size,), jnp.float32),
        "kernel_w": conv_init(ks[12], (kernel_num, A, 1)),
        "kernel_b": 0.1 * jax.random.normal(ks[13], (kernel_num,), jnp.float32),
        "weight": 0.3 * jax.random.normal(
            ks[14], (kernel_num, out_planes, in_planes, kernel_size), jnp.float32),
    }

    out = odconv1d(x, p, padding=padding)
    out = jax.block_until_ready(out)

    ref = reference_odconv1d(x, p, padding=padding)
    assert out.shape == (B, out_planes, L + 2 * padding - kernel_size + 1)
    # bf16 MXU operands with f32 accumulation -> looser tolerance than f32.
    assert jnp.allclose(out, ref, atol=1e-2, rtol=1e-2), (
        float(jnp.max(jnp.abs(out - ref))))

    print("KERNEL_OK")
</pallas_src>

<mosaic_0001>
module attributes {stable_mosaic.version = 11 : i64} {
  func.func @_odconv1d_kernel(%arg0: i32, %arg1: memref<1x16x4xf32, #tpu.memory_space<vmem>>, %arg2: memref<1x1x12xf32, #tpu.memory_space<vmem>>, %arg3: memref<1x8x1xf32, #tpu.memory_space<vmem>>, %arg4: memref<1x1x4xf32, #tpu.memory_space<vmem>>, %arg5: memref<4x8x12xbf16, #tpu.memory_space<vmem>>, %arg6: memref<1x8x16xf32, #tpu.memory_space<vmem>>, %arg7: memref<18x4xf32, #tpu.memory_space<vmem>>) attributes {dimension_semantics = [#tpu.dimension_semantics<parallel>], iteration_bounds = array<i64: 2>, scalar_prefetch = 0 : i64, scratch_operands = 1 : i64, tpu.core_type = #tpu.core_type<tc>, window_params = [{transform_indices = @transform_0, window_bounds = array<i64: 1, 16, 4>}, {transform_indices = @transform_1, window_bounds = array<i64: 1, 1, 12>}, {transform_indices = @transform_2, window_bounds = array<i64: 1, 8, 1>}, {transform_indices = @transform_3, window_bounds = array<i64: 1, 1, 4>}, {pipeline_mode = #tpu.pipeline_mode<synchronous>, transform_indices = @transform_4, window_bounds = array<i64: 4, 8, 12>}, {transform_indices = @transform_5, window_bounds = array<i64: 1, 8, 16>}]} {
    %c0 = arith.constant 0 : index
    %c0_0 = arith.constant 0 : index
    %c0_1 = arith.constant 0 : index
    %0 = vector.load %arg4[%c0, %c0_0, %c0_1] : memref<1x1x4xf32, #tpu.memory_space<vmem>>, vector<1x1x4xf32>
    %1 = vector.shape_cast %0 : vector<1x1x4xf32> to vector<1x4xf32>
    %2 = vector.extract_strided_slice %1 {offsets = [0, 0], sizes = [1, 1], strides = [1, 1]} : vector<1x4xf32> to vector<1x1xf32>
    %c0_2 = arith.constant 0 : index
    %c0_3 = arith.constant 0 : index
    %c0_4 = arith.constant 0 : index
    %3 = vector.load %arg5[%c0_2, %c0_3, %c0_4] : memref<4x8x12xbf16, #tpu.memory_space<vmem>>, vector<1x8x12xbf16>
    %4 = vector.shape_cast %3 : vector<1x8x12xbf16> to vector<8x12xbf16>
    %5 = arith.extf %4 : vector<8x12xbf16> to vector<8x12xf32>
    %6 = vector.broadcast %2 : vector<1x1xf32> to vector<8x12xf32>
    %7 = arith.mulf %6, %5 : vector<8x12xf32>
    %8 = vector.extract_strided_slice %1 {offsets = [0, 1], sizes = [1, 1], strides = [1, 1]} : vector<1x4xf32> to vector<1x1xf32>
    %c1 = arith.constant 1 : index
    %c0_5 = arith.constant 0 : index
    %c0_6 = arith.constant 0 : index
    %9 = vector.load %arg5[%c1, %c0_5, %c0_6] : memref<4x8x12xbf16, #tpu.memory_space<vmem>>, vector<1x8x12xbf16>
    %10 = vector.shape_cast %9 : vector<1x8x12xbf16> to vector<8x12xbf16>
    %11 = arith.extf %10 : vector<8x12xbf16> to vector<8x12xf32>
    %12 = vector.broadcast %8 : vector<1x1xf32> to vector<8x12xf32>
    %13 = arith.mulf %12, %11 : vector<8x12xf32>
    %14 = arith.addf %7, %13 : vector<8x12xf32>
    %15 = vector.extract_strided_slice %1 {offsets = [0, 2], sizes = [1, 1], strides = [1, 1]} : vector<1x4xf32> to vector<1x1xf32>
    %c2 = arith.constant 2 : index
    %c0_7 = arith.constant 0 : index
    %c0_8 = arith.constant 0 : index
    %16 = vector.load %arg5[%c2, %c0_7, %c0_8] : memref<4x8x12xbf16, #tpu.memory_space<vmem>>, vector<1x8x12xbf16>
    %17 = vector.shape_cast %16 : vector<1x8x12xbf16> to vector<8x12xbf16>
    %18 = arith.extf %17 : vector<8x12xbf16> to vector<8x12xf32>
    %19 = vector.broadcast %15 : vector<1x1xf32> to vector<8x12xf32>
    %20 = arith.mulf %19, %18 : vector<8x12xf32>
    %21 = arith.addf %14, %20 : vector<8x12xf32>
    %22 = vector.extract_strided_slice %1 {offsets = [0, 3], sizes = [1, 1], strides = [1, 1]} : vector<1x4xf32> to vector<1x1xf32>
    %c3 = arith.constant 3 : index
    %c0_9 = arith.constant 0 : index
    %c0_10 = arith.constant 0 : index
    %23 = vector.load %arg5[%c3, %c0_9, %c0_10] : memref<4x8x12xbf16, #tpu.memory_space<vmem>>, vector<1x8x12xbf16>
    %24 = vector.shape_cast %23 : vector<1x8x12xbf16> to vector<8x12xbf16>
    %25 = arith.extf %24 : vector<8x12xbf16> to vector<8x12xf32>
    %26 = vector.broadcast %22 : vector<1x1xf32> to vector<8x12xf32>
    %27 = arith.mulf %26, %25 : vector<8x12xf32>
    %28 = arith.addf %21, %27 : vector<8x12xf32>
    %c0_11 = arith.constant 0 : index
    %c0_12 = arith.constant 0 : index
    %c0_13 = arith.constant 0 : index
    %29 = vector.load %arg2[%c0_11, %c0_12, %c0_13] : memref<1x1x12xf32, #tpu.memory_space<vmem>>, vector<1x1x12xf32>
    %30 = vector.shape_cast %29 : vector<1x1x12xf32> to vector<1x12xf32>
    %31 = vector.broadcast %30 : vector<1x12xf32> to vector<8x12xf32>
    %32 = arith.mulf %28, %31 : vector<8x12xf32>
    %cst = arith.constant 0.000000e+00 : f32
    %33 = vector.broadcast %cst : f32 to vector<1x4xf32>
    %c0_14 = arith.constant 0 : index
    %c0_15 = arith.constant 0 : index
    %34 = vector.load %arg7[%c0_14, %c0_15] : memref<18x4xf32, #tpu.memory_space<vmem>>, vector<1x4xf32>
    tpu.vector_store %arg7[%c0_14, %c0_15], %33 {strides = array<i32>} : memref<18x4xf32, #tpu.memory_space<vmem>>, vector<1x4xf32>,
    %cst_16 = arith.constant 0.000000e+00 : f32
    %35 = vector.broadcast %cst_16 : f32 to vector<1x4xf32>
    %c17 = arith.constant 17 : index
    %c0_17 = arith.constant 0 : index
    %36 = vector.load %arg7[%c17, %c0_17] : memref<18x4xf32, #tpu.memory_space<vmem>>, vector<1x4xf32>
    tpu.vector_store %arg7[%c17, %c0_17], %35 {strides = array<i32>} : memref<18x4xf32, #tpu.memory_space<vmem>>, vector<1x4xf32>,
    %c0_18 = arith.constant 0 : index
    %c0_19 = arith.constant 0 : index
    %c0_20 = arith.constant 0 : index
    %37 = vector.load %arg1[%c0_18, %c0_19, %c0_20] : memref<1x16x4xf32, #tpu.memory_space<vmem>>, vector<1x16x4xf32>
    %38 = vector.shape_cast %37 : vector<1x16x4xf32> to vector<16x4xf32>
    %c1_21 = arith.constant 1 : index
    %c0_22 = arith.constant 0 : index
    %39 = vector.load %arg7[%c1_21, %c0_22] : memref<18x4xf32, #tpu.memory_space<vmem>>, vector<16x4xf32>
    tpu.vector_store %arg7[%c1_21, %c0_22], %38 {strides = array<i32>} : memref<18x4xf32, #tpu.memory_space<vmem>>, vector<16x4xf32>,
    %c0_23 = arith.constant 0 : index
    %c0_24 = arith.constant 0 : index
    %40 = vector.load %arg7[%c0_23, %c0_24] : memref<18x4xf32, #tpu.memory_space<vmem>>, vector<18x4xf32>
    %41 = vector.extract_strided_slice %32 {offsets = [0, 0], sizes = [8, 4], strides = [1, 1]} : vector<8x12xf32> to vector<8x4xf32>
    %42 = arith.truncf %41 : vector<8x4xf32> to vector<8x4xbf16>
    %43 = vector.extract_strided_slice %40 {offsets = [0, 0], sizes = [16, 4], strides = [1, 1]} : vector<18x4xf32> to vector<16x4xf32>
    %44 = arith.truncf %43 : vector<16x4xf32> to vector<16x4xbf16>
    %cst_25 = arith.constant dense<0.000000e+00> : vector<8x16xf32>
    %45 = tpu.matmul %42, %44, %cst_25 {dimension_numbers = #tpu.dot_dimension_numbers<[1], [1], [0], [0], [0, 0, 1, 0], [], []>} : vector<8x4xbf16>, vector<16x4xbf16>, vector<8x16xf32> -> vector<8x16xf32>
    %46 = vector.extract_strided_slice %32 {offsets = [0, 4], sizes = [8, 4], strides = [1, 1]} : vector<8x12xf32> to vector<8x4xf32>
    %47 = arith.truncf %46 : vector<8x4xf32> to vector<8x4xbf16>
    %48 = vector.extract_strided_slice %40 {offsets = [1, 0], sizes = [16, 4], strides = [1, 1]} : vector<18x4xf32> to vector<16x4xf32>
    %49 = arith.truncf %48 : vector<16x4xf32> to vector<16x4xbf16>
    %cst_26 = arith.constant dense<0.000000e+00> : vector<8x16xf32>
    %50 = tpu.matmul %47, %49, %cst_26 {dimension_numbers = #tpu.dot_dimension_numbers<[1], [1], [0], [0], [0, 0, 1, 0], [], []>} : vector<8x4xbf16>, vector<16x4xbf16>, vector<8x16xf32> -> vector<8x16xf32>
    %51 = arith.addf %45, %50 : vector<8x16xf32>
    %52 = vector.extract_strided_slice %32 {offsets = [0, 8], sizes = [8, 4], strides = [1, 1]} : vector<8x12xf32> to vector<8x4xf32>
    %53 = arith.truncf %52 : vector<8x4xf32> to vector<8x4xbf16>
    %54 = vector.extract_strided_slice %40 {offsets = [2, 0], sizes = [16, 4], strides = [1, 1]} : vector<18x4xf32> to vector<16x4xf32>
    %55 = arith.truncf %54 : vector<16x4xf32> to vector<16x4xbf16>
    %cst_27 = arith.constant dense<0.000000e+00> : vector<8x16xf32>
    %56 = tpu.matmul %53, %55, %cst_27 {dimension_numbers = #tpu.dot_dimension_numbers<[1], [1], [0], [0], [0, 0, 1, 0], [], []>} : vector<8x4xbf16>, vector<16x4xbf16>, vector<8x16xf32> -> vector<8x16xf32>
    %57 = arith.addf %51, %56 : vector<8x16xf32>
    %c0_28 = arith.constant 0 : index
    %c0_29 = arith.constant 0 : index
    %c0_30 = arith.constant 0 : index
    %58 = vector.load %arg3[%c0_28, %c0_29, %c0_30] : memref<1x8x1xf32, #tpu.memory_space<vmem>>, vector<1x8x1xf32>
    %59 = vector.shape_cast %58 : vector<1x8x1xf32> to vector<8x1xf32>
    %60 = vector.broadcast %59 : vector<8x1xf32> to vector<8x16xf32>
    %61 = arith.mulf %57, %60 : vector<8x16xf32>
    %c0_31 = arith.constant 0 : index
    %c0_32 = arith.constant 0 : index
    %c0_33 = arith.constant 0 : index
    %62 = vector.load %arg6[%c0_31, %c0_32, %c0_33] : memref<1x8x16xf32, #tpu.memory_space<vmem>>, vector<1x8x16xf32>
    %63 = vector.shape_cast %62 : vector<1x8x16xf32> to vector<8x16xf32>
    %64 = vector.shape_cast %61 : vector<8x16xf32> to vector<1x8x16xf32>
    tpu.vector_store %arg6[%c0_31, %c0_32, %c0_33], %64 {strides = array<i32>} : memref<1x8x16xf32, #tpu.memory_space<vmem>>, vector<1x8x16xf32>,
    return
  }
  func.func @transform_0(%arg0: i32) -> (i32, i32, i32) {
    %c0_i32 = arith.constant 0 : i32
    %c0_i32_0 = arith.constant 0 : i32
    %c0_i32_1 = arith.constant 0 : i32
    return %arg0, %c0_i32, %c0_i32_0 : i32, i32, i32
  }
  func.func @transform_1(%arg0: i32) -> (i32, i32, i32) {
    %c0_i32 = arith.constant 0 : i32
    %c0_i32_0 = arith.constant 0 : i32
    %c0_i32_1 = arith.constant 0 : i32
    return %arg0, %c0_i32, %c0_i32_0 : i32, i32, i32
  }
  func.func @transform_2(%arg0: i32) -> (i32, i32, i32) {
    %c0_i32 = arith.constant 0 : i32
    %c0_i32_0 = arith.constant 0 : i32
    %c0_i32_1 = arith.constant 0 : i32
    return %arg0, %c0_i32, %c0_i32_0 : i32, i32, i32
  }
  func.func @transform_3(%arg0: i32) -> (i32, i32, i32) {
    %c0_i32 = arith.constant 0 : i32
    %c0_i32_0 = arith.constant 0 : i32
    %c0_i32_1 = arith.constant 0 : i32
    return %arg0, %c0_i32, %c0_i32_0 : i32, i32, i32
  }
  func.func @transform_4(%arg0: i32) -> (i32, i32, i32) {
    %c0_i32 = arith.constant 0 : i32
    %c0_i32_0 = arith.constant 0 : i32
    %c0_i32_1 = arith.constant 0 : i32
    %c0_i32_2 = arith.constant 0 : i32
    return %c0_i32, %c0_i32_0, %c0_i32_1 : i32, i32, i32
  }
  func.func @transform_5(%arg0: i32) -> (i32, i32, i32) {
    %c0_i32 = arith.constant 0 : i32
    %c0_i32_0 = arith.constant 0 : i32
    %c0_i32_1 = arith.constant 0 : i32
    return %arg0, %c0_i32, %c0_i32_0 : i32, i32, i32
  }
}

</mosaic_0001>

<llo_original>
// kernel: tpu_custom_call.1
$region0: #{tpu_custom_call.1}
  #allocation0 [shape = 'u32[]', space=smem, size = 0x4, offset = 0x4, fixed_abs, tag = 'smem constant byte address 0x4 - core index']
  #allocation1 [shape = 'u32[144,128]{1,0:T(1,128)}', space=vmem, size = 0x12000, scoped, tag = 'internal scratch']
  #allocation2 [shape = 'f32[18,4]{1,0:T(8,128)}', space=vmem, size = 0x3000, scoped, tag = 'scratch operand']
  %s0 = inlined_call_operand.hbm [shape: f32[2,16,4], index: 0, kind: input, shape index: {}]
  %s1 = inlined_call_operand.hbm [shape: f32[2,1,12], index: 1, kind: input, shape index: {}]
  %s2 = inlined_call_operand.hbm [shape: f32[2,8,1], index: 2, kind: input, shape index: {}]
  %s3 = inlined_call_operand.hbm [shape: f32[2,1,4], index: 3, kind: input, shape index: {}]
  %s4 = inlined_call_operand.hbm [shape: bf16[4,8,12], index: 4, kind: input, shape index: {}]
  %s5 = inlined_call_operand.hbm [shape: f32[2,8,16], index: 5, kind: output, shape index: {}]
  %s6 = sld [smem:[#allocation0]]
  $region73: #{tpu_custom_call.1} parent=0
    _
  %s8 = ssub.s32 1, %s6
  %s9 = scalar_select 0, %s8, %s6
  $region1: #{tpu_custom_call.1} parent=0
    #allocation3 [shape = 'u8[16384]{0}', space=vmem, size = 0x4000, scoped, tag = 'input window, operand 0']
    #allocation4 [shape = 's32[2]{0}', space=sflag, size = 0x8, scoped, tag = 'scoped memory for tpu_custom_call.1']
    #allocation5 [shape = 's32[2]{0}', space=sflag, size = 0x8, scoped, tag = 'scoped memory for tpu_custom_call.1']
    #allocation6 [shape = 'u8[1024]{0}', space=vmem, size = 0x400, scoped, tag = 'input window, operand 1']
    #allocation7 [shape = 's32[2]{0}', space=sflag, size = 0x8, scoped, tag = 'scoped memory for tpu_custom_call.1']
    #allocation8 [shape = 'u8[8192]{0}', space=vmem, size = 0x2000, scoped, tag = 'input window, operand 2']
    #allocation9 [shape = 'u8[1024]{0}', space=vmem, size = 0x400, scoped, tag = 'input window, operand 3']
    #allocation10 [shape = 's32[2]{0}', space=sflag, size = 0x8, scoped, tag = 'scoped memory for tpu_custom_call.1']
    #allocation11 [shape = 'u8[8192]{0}', space=vmem, size = 0x2000, scoped, tag = 'input window, operand 4, single buffered']
    #allocation12 [shape = 'u8[8192]{0}', space=vmem, size = 0x2000, scoped, tag = 'output window, operand 0']
    %10 = vsyncpa [#allocation4], 0
    %s11 = scalar_lea.sflag [#allocation4], 1
    %12 = vsyncpa %s11, 0
    %13 = vsyncpa [#allocation7], 0
    %s14 = scalar_lea.sflag [#allocation7], 1
    %15 = vsyncpa %s14, 0
    %16 = vsyncpa [#allocation10], 0
    %s17 = scalar_lea.sflag [#allocation10], 1
    %18 = vsyncpa %s17, 0
    %19 = vsyncpa [#allocation5], 0
    %s20 = scalar_lea.sflag [#allocation5], 1
    %21 = vsyncpa %s20, 0
    loop: start=0, step=1, limit=4
    $region2: #{tpu_custom_call.1} parent=1 // loop_pre_header
      _
    $region3: #{tpu_custom_call.1} parent=1 // loop_header
      %s23 = sphi 0, %s27
      %p24 = scmp.ge.s32.totalorder %s23, 4
      %s33 = sphi 0, %s35
      %s36 = sphi 0, %s33
      %s37 = sphi 0, %s36
      %s53 = sphi 0, %s37
      %s59 = sphi 0, %s61
      %s62 = sphi 0, %s59
      %s63 = sphi 0, %s62
      %s79 = sphi 0, %s63
      %s85 = sphi 0, %s87
      %s88 = sphi 0, %s85
      %s89 = sphi 0, %s88
      %s105 = sphi 0, %s89
      %s111 = sphi 0, %s113
      %s114 = sphi 0, %s111
      %s115 = sphi 0, %s114
      %s131 = sphi 0, %s115
      %s135 = sphi 0, %s135
      %s137 = sphi 0, %s135
      %s138 = sphi 0, %s137
      %s152 = sphi 0, %s138
      %s158 = sphi 0, %s160
      %s161 = sphi 0, %s158
      %s162 = sphi 0, %s161
      %s178 = sphi 0, %s162
    $region4: #{tpu_custom_call.1} parent=1 // loop_header_branch
      %26 = sbr.rel (%p24) target = $region8
    $region5: #{tpu_custom_call.1} parent=1 // loop_body
      %s28 = ssub.s32 %s23, 1
      %s29 = ssub.s32 %s23, 2
      %s30 = sadd.s32 %s23, 1
      %s31 = ssub.s32 %s23, %s30
      %p32 = scmp.eq.s32.totalorder %s31, 0
      %s34 = sadd.s32 %s33, 1
      %s35 = scalar_select %p32, %s33, %s34
      %p38 = pneg %p32
      %p39 = scmp.eq.s32.totalorder %s23, 1
      %p40 = por %p38, %p39
      %p41 = scmp.ne.s32.totalorder %s33, %s36
      %p42 = scmp.eq.s32.totalorder %s23, 0
      %p43 = por %p41, %p42
      %p44 = scmp.ne.s32.totalorder %s33, %s36
      %p45 = scmp.eq.s32.totalorder %s28, 1
      %p46 = por %p44, %p45
      %p47 = scmp.ne.s32.totalorder %s36, %s37
      %p48 = scmp.eq.s32.totalorder %s28, 0
      %p49 = por %p47, %p48
      %p50 = scmp.ne.s32.totalorder %s36, %s37
      %p51 = scmp.eq.s32.totalorder %s29, 1
      %p52 = por %p50, %p51
      %p54 = scmp.ne.s32.totalorder %s37, %s53
      %p55 = scmp.eq.s32.totalorder %s29, 0
      %p56 = por %p54, %p55
      %s57 = ssub.s32 %s23, %s30
      %p58 = scmp.eq.s32.totalorder %s57, 0
      %s60 = sadd.s32 %s59, 1
      %s61 = scalar_select %p58, %s59, %s60
      %p64 = pneg %p58
      %p65 = scmp.eq.s32.totalorder %s23, 1
      %p66 = por %p64, %p65
      %p67 = scmp.ne.s32.totalorder %s59, %s62
      %p68 = scmp.eq.s32.totalorder %s23, 0
      %p69 = por %p67, %p68
      %p70 = scmp.ne.s32.totalorder %s59, %s62
      %p71 = scmp.eq.s32.totalorder %s28, 1
      %p72 = por %p70, %p71
      %p73 = scmp.ne.s32.totalorder %s62, %s63
      %p74 = scmp.eq.s32.totalorder %s28, 0
      %p75 = por %p73, %p74
      %p76 = scmp.ne.s32.totalorder %s62, %s63
      %p77 = scmp.eq.s32.totalorder %s29, 1
      %p78 = por %p76, %p77
      %p80 = scmp.ne.s32.totalorder %s63, %s79
      %p81 = scmp.eq.s32.totalorder %s29, 0
      %p82 = por %p80, %p81
      %s83 = ssub.s32 %s23, %s30
      %p84 = scmp.eq.s32.totalorder %s83, 0
      %s86 = sadd.s32 %s85, 1
      %s87 = scalar_select %p84, %s85, %s86
      %p90 = pneg %p84
      %p91 = scmp.eq.s32.totalorder %s23, 1
      %p92 = por %p90, %p91
      %p93 = scmp.ne.s32.totalorder %s85, %s88
      %p94 = scmp.eq.s32.totalorder %s23, 0
      %p95 = por %p93, %p94
      %p96 = scmp.ne.s32.totalorder %s85, %s88
      %p97 = scmp.eq.s32.totalorder %s28, 1
      %p98 = por %p96, %p97
      %p99 = scmp.ne.s32.totalorder %s88, %s89
      %p100 = scmp.eq.s32.totalorder %s28, 0
      %p101 = por %p99, %p100
      %p102 = scmp.ne.s32.totalorder %s88, %s89
      %p103 = scmp.eq.s32.totalorder %s29, 1
      %p104 = por %p102, %p103
      %p106 = scmp.ne.s32.totalorder %s89, %s105
      %p107 = scmp.eq.s32.totalorder %s29, 0
      %p108 = por %p106, %p107
      %s109 = ssub.s32 %s23, %s30
      %p110 = scmp.eq.s32.totalorder %s109, 0
      %s112 = sadd.s32 %s111, 1
      %s113 = scalar_select %p110, %s111, %s112
      %p116 = pneg %p110
      %p117 = scmp.eq.s32.totalorder %s23, 1
      %p118 = por %p116, %p117
      %p119 = scmp.ne.s32.totalorder %s111, %s114
      %p120 = scmp.eq.s32.totalorder %s23, 0
      %p121 = por %p119, %p120
      %p122 = scmp.ne.s32.totalorder %s111, %s114
      %p123 = scmp.eq.s32.totalorder %s28, 1
      %p124 = por %p122, %p123
      %p125 = scmp.ne.s32.totalorder %s114, %s115
      %p126 = scmp.eq.s32.totalorder %s28, 0
      %p127 = por %p125, %p126
      %p128 = scmp.ne.s32.totalorder %s114, %s115
      %p129 = scmp.eq.s32.totalorder %s29, 1
      %p130 = por %p128, %p129
      %p132 = scmp.ne.s32.totalorder %s115, %s131
      %p133 = scmp.eq.s32.totalorder %s29, 0
      %p134 = por %p132, %p133
      %s136 = sadd.s32 %s135, 1
      %p139 = scmp.eq.s32.totalorder %s23, 1
      %p140 = scmp.ne.s32.totalorder %s135, %s137
      %p141 = scmp.eq.s32.totalorder %s23, 0
      %p142 = por %p140, %p141
      %p143 = scmp.ne.s32.totalorder %s135, %s137
      %p144 = scmp.eq.s32.totalorder %s28, 1
      %p145 = por %p143, %p144
      %p146 = scmp.ne.s32.totalorder %s137, %s138
      %p147 = scmp.eq.s32.totalorder %s28, 0
      %p148 = por %p146, %p147
      %p149 = scmp.ne.s32.totalorder %s137, %s138
      %p150 = scmp.eq.s32.totalorder %s29, 1
      %p151 = por %p149, %p150
      %p153 = scmp.ne.s32.totalorder %s138, %s152
      %p154 = scmp.eq.s32.totalorder %s29, 0
      %p155 = por %p153, %p154
      %s156 = ssub.s32 %s23, %s30
      %p157 = scmp.eq.s32.totalorder %s156, 0
      %s159 = sadd.s32 %s158, 1
      %s160 = scalar_select %p157, %s158, %s159
      %p163 = pneg %p157
      %p164 = scmp.eq.s32.totalorder %s23, 1
      %p165 = por %p163, %p164
      %p166 = scmp.ne.s32.totalorder %s158, %s161
      %p167 = scmp.eq.s32.totalorder %s23, 0
      %p168 = por %p166, %p167
      %p169 = scmp.ne.s32.totalorder %s158, %s161
      %p170 = scmp.eq.s32.totalorder %s28, 1
      %p171 = por %p169, %p170
      %p172 = scmp.ne.s32.totalorder %s161, %s162
      %p173 = scmp.eq.s32.totalorder %s28, 0
      %p174 = por %p172, %p173
      %p175 = scmp.ne.s32.totalorder %s161, %s162
      %p176 = scmp.eq.s32.totalorder %s29, 1
      %p177 = por %p175, %p176
      %p179 = scmp.ne.s32.totalorder %s162, %s178
      %p180 = scmp.eq.s32.totalorder %s29, 0
      %p181 = por %p179, %p180
      %p182 = scmp.le.s32.totalorder 1, %s23
      %p183 = scmp.lt.s32.totalorder %s23, 3
      %p184 = pnand %p182, %p183
      %p185 = pneg %p184
      // Predicated region
      $region9: #{tpu_custom_call.1} parent=5 // pred_check
        _
      $region10: #{tpu_custom_call.1} parent=5 // pred_check_branch
        %187 = sbr.rel (%p184) target = $region12
      $region11: #{tpu_custom_call.1} parent=5 // pred_region
        %s188 = ssub.s32 %s23, 1
        // Predicated region
        $region13: #{tpu_custom_call.1} parent=11 // pred_check
          %p189 = pneg %p148
        $region14: #{tpu_custom_call.1} parent=11 // pred_check_branch
          %191 = sbr.rel (%p189) target = $region16
        $region15: #{tpu_custom_call.1} parent=11 // pred_region
          %s193 = ssub.s32 256, 256
          %194 = vsyncadd [#allocation10], %s193
          %s195 = sshll.u32 [#allocation11], 4
          %s196 = int_to_ptr.vmem [resolvable:$true] %s195
          %201 = dma.hbm_to_vmem [thread:$0]  %s4, 256, %s196, [#allocation10], 64, 64, 4
        $region16: #{tpu_custom_call.1} parent=11 // pred_fallthru
          _
      $region12: #{tpu_custom_call.1} parent=5 // pred_fallthru
        _
      %p202 = scmp.lt.s32.totalorder %s23, 2
      // Predicated region
      $region17: #{tpu_custom_call.1} parent=5 // pred_check
        %p203 = pneg %p202
      $region18: #{tpu_custom_call.1} parent=5 // pred_check_branch
        %205 = sbr.rel (%p203) target = $region20
      $region19: #{tpu_custom_call.1} parent=5 // pred_region
        // Predicated region
        $region21: #{tpu_custom_call.1} parent=19 // pred_check
          %p206 = pneg %p43
        $region22: #{tpu_custom_call.1} parent=19 // pred_check_branch
          %208 = sbr.rel (%p206) target = $region24
        $region23: #{tpu_custom_call.1} parent=19 // pred_region
          %s209 = sand.u32 %s33, 1
          %s210 = scalar_lea.sflag [#allocation4], %s209
          %s211 = sand.u32 %s33, 1
          %s212 = smul.addr %s211, 16
          %s213 = scalar_lea.vmem [#allocation3], %s212
          %s215 = ssub.s32 256, 256
          %216 = vsyncadd %s210, %s215
          %s217 = smul.addr %s23, 2
          %s218 = smul.addr %s217, 128
          %s219 = scalar_lea.hbm %s0, %s218
          %s220 = sshll.u32 %s213, 4
          %s221 = int_to_ptr.vmem [resolvable:$true] %s220
          %226 = dma.hbm_to_vmem [thread:$0]  %s219, 256, %s221, %s210, 128, 128, 8
        $region24: #{tpu_custom_call.1} parent=19 // pred_fallthru
          _
        // Predicated region
        $region25: #{tpu_custom_call.1} parent=19 // pred_check
          %p227 = pneg %p69
        $region26: #{tpu_custom_call.1} parent=19 // pred_check_branch
          %229 = sbr.rel (%p227) target = $region28
        $region27: #{tpu_custom_call.1} parent=19 // pred_region
          %s230 = sand.u32 %s23, 1
          %s231 = scalar_lea.sflag [#allocation7], %s230
          %s232 = sand.u32 %s59, 1
          %s233 = scalar_lea.vmem [#allocation6], %s232
          %s235 = ssub.s32 16, 16
          %236 = vsyncadd %s231, %s235
          %s237 = smul.addr %s23, 16
          %s238 = scalar_lea.hbm %s1, %s237
          %s240 = sshll.u32 %s233, 4
          %s241 = int_to_ptr.vmem [resolvable:$true] %s240
          %243 = dma.hbm_to_vmem [thread:$0]  %s238, 16, %s241, %s231
        $region28: #{tpu_custom_call.1} parent=19 // pred_fallthru
          _
        // Predicated region
        $region29: #{tpu_custom_call.1} parent=19 // pred_check
          %p244 = pneg %p95
        $region30: #{tpu_custom_call.1} parent=19 // pred_check_branch
          %246 = sbr.rel (%p244) target = $region32
        $region31: #{tpu_custom_call.1} parent=19 // pred_region
          %s247 = sand.u32 %s23, 1
          %s248 = scalar_lea.sflag [#allocation7], %s247
          %s249 = sand.u32 %s85, 1
          %s250 = smul.addr %s249, 8
          %s251 = scalar_lea.vmem [#allocation8], %s250
          %s253 = ssub.s32 128, 128
          %254 = vsyncadd %s248, %s253
          %s255 = smul.addr %s23, 128
          %s256 = scalar_lea.hbm %s2, %s255
          %s258 = sshll.u32 %s251, 4
          %s259 = int_to_ptr.vmem [resolvable:$true] %s258
          %261 = dma.hbm_to_vmem [thread:$0]  %s256, 128, %s259, %s248
        $region32: #{tpu_custom_call.1} parent=19 // pred_fallthru
          _
        // Predicated region
        $region33: #{tpu_custom_call.1} parent=19 // pred_check
          %p262 = pneg %p121
        $region34: #{tpu_custom_call.1} parent=19 // pred_check_branch
          %264 = sbr.rel (%p262) target = $region36
        $region35: #{tpu_custom_call.1} parent=19 // pred_region
          %s265 = sand.u32 %s23, 1
          %s266 = scalar_lea.sflag [#allocation10], %s265
          %s267 = sand.u32 %s111, 1
          %s268 = scalar_lea.vmem [#allocation9], %s267
          %s270 = ssub.s32 16, 16
          %271 = vsyncadd %s266, %s270
          %s272 = smul.addr %s23, 16
          %s273 = scalar_lea.hbm %s3, %s272
          %s275 = sshll.u32 %s268, 4
          %s276 = int_to_ptr.vmem [resolvable:$true] %s275
          %278 = dma.hbm_to_vmem [thread:$0]  %s273, 16, %s276, %s266
        $region36: #{tpu_custom_call.1} parent=19 // pred_fallthru
          _
      $region20: #{tpu_custom_call.1} parent=5 // pred_fallthru
        _
      %p279 = scmp.le.s32.totalorder 1, %s23
      %p280 = scmp.lt.s32.totalorder %s23, 3
      %p281 = pnand %p279, %p280
      %p282 = pneg %p281
      // Predicated region
      $region37: #{tpu_custom_call.1} parent=5 // pred_check
        _
      $region38: #{tpu_custom_call.1} parent=5 // pred_check_branch
        %284 = sbr.rel (%p281) target = $region40
      $region39: #{tpu_custom_call.1} parent=5 // pred_region
        %s285 = ssub.s32 %s23, 1
        %s286 = sand.u32 %s36, 1
        %s287 = scalar_lea.sflag [#allocation4], %s286
        %s288 = sand.u32 %s36, 1
        %s289 = smul.addr %s288, 16
        %s290 = scalar_lea.vmem [#allocation3], %s289
        // Predicated region
        $region41: #{tpu_custom_call.1} parent=39 // pred_check
          %p291 = pneg %p49
        $region42: #{tpu_custom_call.1} parent=39 // pred_check_branch
          %293 = sbr.rel (%p291) target = $region44
        $region43: #{tpu_custom_call.1} parent=39 // pred_region
          %294 = dma.done %s287, 256
        $region44: #{tpu_custom_call.1} parent=39 // pred_fallthru
          _
        %s295 = sand.u32 %s28, 1
        %s296 = scalar_lea.sflag [#allocation7], %s295
        %s297 = sand.u32 %s62, 1
        %s298 = scalar_lea.vmem [#allocation6], %s297
        // Predicated region
        $region45: #{tpu_custom_call.1} parent=39 // pred_check
          %p299 = pneg %p75
        $region46: #{tpu_custom_call.1} parent=39 // pred_check_branch
          %301 = sbr.rel (%p299) target = $region48
        $region47: #{tpu_custom_call.1} parent=39 // pred_region
          %302 = dma.done %s296, 16
        $region48: #{tpu_custom_call.1} parent=39 // pred_fallthru
          _
        %s303 = sand.u32 %s28, 1
        %s304 = scalar_lea.sflag [#allocation7], %s303
        %s305 = sand.u32 %s88, 1
        %s306 = smul.addr %s305, 8
        %s307 = scalar_lea.vmem [#allocation8], %s306
        // Predicated region
        $region49: #{tpu_custom_call.1} parent=39 // pred_check
          %p308 = pneg %p101
        $region50: #{tpu_custom_call.1} parent=39 // pred_check_branch
          %310 = sbr.rel (%p308) target = $region52
        $region51: #{tpu_custom_call.1} parent=39 // pred_region
          %311 = dma.done %s304, 128
        $region52: #{tpu_custom_call.1} parent=39 // pred_fallthru
          _
        %s312 = sand.u32 %s28, 1
        %s313 = scalar_lea.sflag [#allocation10], %s312
        %s314 = sand.u32 %s114, 1
        %s315 = scalar_lea.vmem [#allocation9], %s314
        // Predicated region
        $region53: #{tpu_custom_call.1} parent=39 // pred_check
          %p316 = pneg %p127
        $region54: #{tpu_custom_call.1} parent=39 // pred_check_branch
          %318 = sbr.rel (%p316) target = $region56
        $region55: #{tpu_custom_call.1} parent=39 // pred_region
          %319 = dma.done %s313, 16
        $region56: #{tpu_custom_call.1} parent=39 // pred_fallthru
          _
        // Predicated region
        $region57: #{tpu_custom_call.1} parent=39 // pred_check
          %p320 = pneg %p148
        $region58: #{tpu_custom_call.1} parent=39 // pred_check_branch
          %322 = sbr.rel (%p320) target = $region60
        $region59: #{tpu_custom_call.1} parent=39 // pred_region
          %323 = dma.done [#allocation10], 256
        $region60: #{tpu_custom_call.1} parent=39 // pred_fallthru
          _
        %s324 = sand.u32 %s36, 1
        %s325 = scalar_lea.sflag [#allocation4], %s324
        %s326 = sand.u32 %s36, 1
        %s327 = smul.addr %s326, 16
        %s328 = scalar_lea.vmem [#allocation3], %s327
        %p329 = pneg %p49
        %p330 = pneg %p46
        %s331 = sand.u32 %s28, 1
        %s332 = scalar_lea.sflag [#allocation7], %s331
        %s333 = sand.u32 %s62, 1
        %s334 = scalar_lea.vmem [#allocation6], %s333
        %p335 = pneg %p75
        %p336 = pneg %p72
        %s337 = sand.u32 %s28, 1
        %s338 = scalar_lea.sflag [#allocation7], %s337
        %s339 = sand.u32 %s88, 1
        %s340 = smul.addr %s339, 8
        %s341 = scalar_lea.vmem [#allocation8], %s340
        %p342 = pneg %p101
        %p343 = pneg %p98
        %s344 = sand.u32 %s28, 1
        %s345 = scalar_lea.sflag [#allocation10], %s344
        %s346 = sand.u32 %s114, 1
        %s347 = scalar_lea.vmem [#allocation9], %s346
        %p348 = pneg %p127
        %p349 = pneg %p124
        %p350 = pneg %p148
        %p351 = pneg %p145
        %p352 = pneg %p174
        %p353 = pneg %p171
        %s354 = sand.u32 %s161, 1
        %s355 = scalar_lea.sflag [#allocation5], %s354
        %s356 = sand.u32 %s161, 1
        %s357 = smul.addr %s356, 8
        %s358 = scalar_lea.vmem [#allocation12], %s357
        %v360 = vld [vmem:[%s315] sm:$0x1]
        %v361 = vld [vmem:[#allocation11] sm:$0xf]
        %v362 = vunpack.c.l.bf16 %v361
        %v364 = vlaneseq
        %v365 = vshrl.u32 %v364, 7
        %v366 = vsub.s32 0, %v365
        %v367 = vrot.slane %v360, %v366
        %368 = vset.pattern.permute.xlu0 0
        %369 = vperm.xlu0 %368, %v367
        %v370 = vpop.permute.xlu0 %369
        %v372 = vmul.f32 %v370, %v362
        %s373 = scalar_lea.vmem [#allocation11], 4
        %v374 = vld [vmem:[%s373] sm:$0xf]
        %v375 = vunpack.c.l.bf16 %v374
        %376 = vset.pattern.permute.xlu0 1
        %377 = vperm.xlu0 %376, %v367
        %v378 = vpop.permute.xlu0 %377
        %v380 = vmul.f32 %v378, %v375
        %v381 = vadd.f32 %v372, %v380
        %s382 = scalar_lea.vmem [#allocation11], 8
        %v383 = vld [vmem:[%s382] sm:$0xf]
        %v384 = vunpack.c.l.bf16 %v383
        %385 = vset.pattern.permute.xlu0 2
        %386 = vperm.xlu0 %385, %v367
        %v387 = vpop.permute.xlu0 %386
        %v389 = vmul.f32 %v387, %v384
        %v390 = vadd.f32 %v381, %v389
        %s391 = scalar_lea.vmem [#allocation11], 12
        %v392 = vld [vmem:[%s391] sm:$0xf]
        %v393 = vunpack.c.l.bf16 %v392
        %394 = vset.pattern.permute.xlu0 3
        %395 = vperm.xlu0 %394, %v367
        %v396 = vpop.permute.xlu0 %395
        %v398 = vmul.f32 %v396, %v393
        %v399 = vadd.f32 %v390, %v398
        %v400 = vld [vmem:[%s298] sm:$0x1]
        %v402 = vlaneseq
        %v403 = vshrl.u32 %v402, 7
        %v404 = vsub.s32 0, %v403
        %v405 = vrot.slane %v400, %v404
        %v407 = vmul.f32 %v399, %v405
        %vm408 = vcmask 24576
        %409 = vst.msk [vmem:[#allocation2] sm:$0x1] %vm408, 0.0
        %410 = vst.msk [vmem:[#allocation2 + $0x11] sm:$0x1] %vm408, 0.0
        %v411 = vld [vmem:[%s290] sm:$0xff]
        %v412 = vld [vmem:[%s290 + $0x8] sm:$0xff]
        %vm413 = vcmask 31744
        %414 = vst.msk [vmem:[#allocation2 + $0x1] sm:$0xff] %vm413, %v411
        %415 = vst.msk [vmem:[#allocation2 + $0x9] sm:$0xff] %vm413, %v412
        %v416 = vld [vmem:[#allocation2] sm:$0xff]
        %v417 = vld [vmem:[#allocation2 + $0x8] sm:$0xff]
        %v418 = vld [vmem:[#allocation2 + $0x10] sm:$0x3]
        %v419 = vpack.c.bf16 %v407, %v407
        %v420 = vpack.c.bf16 %v417, %v416
        %v421 = vpack.c.bf16 %v418, %v418
        %423 = vrot.lane.b32.xlu0 %v419, 124
        %v424 = vpop.permute.xlu0 %423
        %vm425 = vsmask.f32 7424
        %v427 = vshrl.u32 %v420, 16
        %v429 = vshll.u32 %v420, 16
        %v431 = vrot.slane %v429, 1
        %v432 = vor.u32 %v427, %v431
        %v434 = vshll.u32 %v421, 16
        %v436 = vrot.slane %v434, 1
        %v437 = vsel %vm425, %v432, %v436
        %v439 = vsel %vm413, %v424, 0
        %v442 = vsel %vm413, %v437, 0
        %444 = vmatprep.subr.bf16.mxu0 0
        %445 = vmatpush1.bf16.xpose.msra.mxu0 %v442
        %446 = vmatprep.subr.bf16.mxu0 0
        %447 = vmatpush1.bf16.xpose.msra.mxu0 0
        %448 = vmatprep.subr.bf16.mxu0 0
        %449 = vmatpush1.bf16.xpose.msra.mxu0 0
        %450 = vmatprep.subr.bf16.mxu0 0
        %451 = vmatpush1.bf16.xpose.msra.mxu0 0
        %452 = vmatprep.subr.bf16.mxu0 0
        %453 = vmatpush1.bf16.xpose.msra.mxu0 0
        %454 = vmatprep.subr.bf16.mxu0 0
        %455 = vmatpush1.bf16.xpose.msra.mxu0 0
        %456 = vmatprep.subr.bf16.mxu0 0
        %457 = vmatpush1.bf16.xpose.msra.mxu0 0
        %458 = vmatprep.subr.bf16.mxu0 0
        %459 = vmatpush1.bf16.xpose.msra.mxu0 0
        %460 = vmatprep.subr.bf16.mxu0 0
        %461 = vmatpush1.bf16.xpose.msra.mxu0 0
        %462 = vmatprep.subr.bf16.mxu0 0
        %463 = vmatpush1.bf16.xpose.msra.mxu0 0
        %464 = vmatprep.subr.bf16.mxu0 0
        %465 = vmatpush1.bf16.xpose.msra.mxu0 0
        %466 = vmatprep.subr.bf16.mxu0 0
        %467 = vmatpush1.bf16.xpose.msra.mxu0 0
        %468 = vmatprep.subr.bf16.mxu0 0
        %469 = vmatpush1.bf16.xpose.msra.mxu0 0
        %470 = vmatprep.subr.bf16.mxu0 0
        %471 = vmatpush1.bf16.xpose.msra.mxu0 0
        %472 = vmatprep.subr.bf16.mxu0 0
        %473 = vmatpush1.bf16.xpose.msra.mxu0 0
        %474 = vmatprep.subr.bf16.mxu0 0
        %475 = vmatpush1.bf16.xpose.msra.mxu0 0
        %476 = vmatprep.mubr.bf16.mxu0 0
        %477 = vmatmul.mubr.bf16.gmra.mrb[0].mxu0 %v439
        %v478 = vpop.f32.mrb[0].mxu0
        %v479 = vadd.f32 0.0, %v478
        %v480 = vpop.f32.mrb[0].mxu0
        %v481 = vpop.f32.mrb[0].mxu0
        %v482 = vpop.f32.mrb[0].mxu0
        %483 = vdwg.mxu0
        %v485 = vsel %vm413, %v419, 0
        %v487 = vsel %vm413, %v420, 0
        %489 = vmatprep.subr.bf16.mxu0 0
        %490 = vmatpush1.bf16.xpose.msra.mxu0 %v487
        %491 = vmatprep.subr.bf16.mxu0 0
        %492 = vmatpush1.bf16.xpose.msra.mxu0 0
        %493 = vmatprep.subr.bf16.mxu0 0
        %494 = vmatpush1.bf16.xpose.msra.mxu0 0
        %495 = vmatprep.subr.bf16.mxu0 0
        %496 = vmatpush1.bf16.xpose.msra.mxu0 0
        %497 = vmatprep.subr.bf16.mxu0 0
        %498 = vmatpush1.bf16.xpose.msra.mxu0 0
        %499 = vmatprep.subr.bf16.mxu0 0
        %500 = vmatpush1.bf16.xpose.msra.mxu0 0
        %501 = vmatprep.subr.bf16.mxu0 0
        %502 = vmatpush1.bf16.xpose.msra.mxu0 0
        %503 = vmatprep.subr.bf16.mxu0 0
        %504 = vmatpush1.bf16.xpose.msra.mxu0 0
        %505 = vmatprep.subr.bf16.mxu0 0
        %506 = vmatpush1.bf16.xpose.msra.mxu0 0
        %507 = vmatprep.subr.bf16.mxu0 0
        %508 = vmatpush1.bf16.xpose.msra.mxu0 0
        %509 = vmatprep.subr.bf16.mxu0 0
        %510 = vmatpush1.bf16.xpose.msra.mxu0 0
        %511 = vmatprep.subr.bf16.mxu0 0
        %512 = vmatpush1.bf16.xpose.msra.mxu0 0
        %513 = vmatprep.subr.bf16.mxu0 0
        %514 = vmatpush1.bf16.xpose.msra.mxu0 0
        %515 = vmatprep.subr.bf16.mxu0 0
        %516 = vmatpush1.bf16.xpose.msra.mxu0 0
        %517 = vmatprep.subr.bf16.mxu0 0
        %518 = vmatpush1.bf16.xpose.msra.mxu0 0
        %519 = vmatprep.subr.bf16.mxu0 0
        %520 = vmatpush1.bf16.xpose.msra.mxu0 0
        %521 = vmatprep.mubr.bf16.mxu0 0
        %522 = vmatmul.mubr.bf16.gmra.mrb[0].mxu0 %v485
        %v523 = vpop.f32.mrb[0].mxu0
        %v524 = vadd.f32 %v479, %v523
        %v525 = vpop.f32.mrb[0].mxu0
        %v526 = vpop.f32.mrb[0].mxu0
        %v527 = vpop.f32.mrb[0].mxu0
        %528 = vdwg.mxu0
        %529 = vrot.lane.b32.xlu0 %v419, 120
        %v530 = vpop.permute.xlu0 %529
        %vm533 = vcmask 1046528
        %v534 = vrot.slane %v420, 1
        %v535 = vrot.slane %v421, 1
        %v536 = vsel %vm533, %v534, %v535
        %v538 = vsel %vm413, %v530, 0
        %v541 = vsel %vm413, %v536, 0
        %543 = vmatprep.subr.bf16.mxu0 0
        %544 = vmatpush1.bf16.xpose.msra.mxu0 %v541
        %545 = vmatprep.subr.bf16.mxu0 0
        %546 = vmatpush1.bf16.xpose.msra.mxu0 0
        %547 = vmatprep.subr.bf16.mxu0 0
        %548 = vmatpush1.bf16.xpose.msra.mxu0 0
        %549 = vmatprep.subr.bf16.mxu0 0
        %550 = vmatpush1.bf16.xpose.msra.mxu0 0
        %551 = vmatprep.subr.bf16.mxu0 0
        %552 = vmatpush1.bf16.xpose.msra.mxu0 0
        %553 = vmatprep.subr.bf16.mxu0 0
        %554 = vmatpush1.bf16.xpose.msra.mxu0 0
        %555 = vmatprep.subr.bf16.mxu0 0
        %556 = vmatpush1.bf16.xpose.msra.mxu0 0
        %557 = vmatprep.subr.bf16.mxu0 0
        %558 = vmatpush1.bf16.xpose.msra.mxu0 0
        %559 = vmatprep.subr.bf16.mxu0 0
        %560 = vmatpush1.bf16.xpose.msra.mxu0 0
        %561 = vmatprep.subr.bf16.mxu0 0
        %562 = vmatpush1.bf16.xpose.msra.mxu0 0
        %563 = vmatprep.subr.bf16.mxu0 0
        %564 = vmatpush1.bf16.xpose.msra.mxu0 0
        %565 = vmatprep.subr.bf16.mxu0 0
        %566 = vmatpush1.bf16.xpose.msra.mxu0 0
        %567 = vmatprep.subr.bf16.mxu0 0
        %568 = vmatpush1.bf16.xpose.msra.mxu0 0
        %569 = vmatprep.subr.bf16.mxu0 0
        %570 = vmatpush1.bf16.xpose.msra.mxu0 0
        %571 = vmatprep.subr.bf16.mxu0 0
        %572 = vmatpush1.bf16.xpose.msra.mxu0 0
        %573 = vmatprep.subr.bf16.mxu0 0
        %574 = vmatpush1.bf16.xpose.msra.mxu0 0
        %575 = vmatprep.mubr.bf16.mxu0 0
        %576 = vmatmul.mubr.bf16.gmra.mrb[0].mxu0 %v538
        %v577 = vpop.f32.mrb[0].mxu0
        %v578 = vadd.f32 0.0, %v577
        %v579 = vpop.f32.mrb[0].mxu0
        %v580 = vpop.f32.mrb[0].mxu0
        %v581 = vpop.f32.mrb[0].mxu0
        %582 = vdwg.mxu0
        %v583 = vadd.f32 %v524, %v578
        %v584 = vld [vmem:[%s307] sm:$0xff]
        %586 = vset.pattern.permute.xlu0 0
        %587 = vperm.xlu0 %586, %v584
        %v588 = vpop.permute.xlu0 %587
        %v590 = vmul.f32 %v583, %v588
        %vm591 = vcmask 130048
        %592 = vst.msk [vmem:[%s358] sm:$0xff] %vm591, %v590
        %s593 = sand.u32 %s161, 1
        %s594 = scalar_lea.sflag [#allocation5], %s593
        %s595 = sand.u32 %s161, 1
        %s596 = smul.addr %s595, 8
        %s597 = scalar_lea.vmem [#allocation12], %s596
        // Predicated region
        $region61: #{tpu_custom_call.1} parent=39 // pred_check
          %p598 = pneg %p171
        $region62: #{tpu_custom_call.1} parent=39 // pred_check_branch
          %600 = sbr.rel (%p598) target = $region64
        $region63: #{tpu_custom_call.1} parent=39 // pred_region
          %s602 = ssub.s32 128, 128
          %603 = vsyncadd %s594, %s602
          %s604 = smul.addr %s28, 128
          %s605 = scalar_lea.hbm %s5, %s604
          %s607 = sshll.u32 %s597, 4
          %s608 = int_to_ptr.vmem [resolvable:$true] %s607
          %610 = dma.vmem_to_hbm [thread:$0]  %s608, 128, %s605, %s594
        $region64: #{tpu_custom_call.1} parent=39 // pred_fallthru
          _
      $region40: #{tpu_custom_call.1} parent=5 // pred_fallthru
        _
      %p611 = scmp.le.s32.totalorder 2, %s23
      // Predicated region
      $region65: #{tpu_custom_call.1} parent=5 // pred_check
        %p612 = pneg %p611
      $region66: #{tpu_custom_call.1} parent=5 // pred_check_branch
        %614 = sbr.rel (%p612) target = $region68
      $region67: #{tpu_custom_call.1} parent=5 // pred_region
        %s615 = ssub.s32 %s23, 2
        // Predicated region
        $region69: #{tpu_custom_call.1} parent=67 // pred_check
          %p616 = pneg %p177
        $region70: #{tpu_custom_call.1} parent=67 // pred_check_branch
          %618 = sbr.rel (%p616) target = $region72
        $region71: #{tpu_custom_call.1} parent=67 // pred_region
          %s619 = sand.u32 %s162, 1
          %s620 = scalar_lea.sflag [#allocation5], %s619
          %s621 = sand.u32 %s162, 1
          %s622 = smul.addr %s621, 8
          %s623 = scalar_lea.vmem [#allocation12], %s622
          %624 = dma.done %s620, 128
        $region72: #{tpu_custom_call.1} parent=67 // pred_fallthru
          _
      $region68: #{tpu_custom_call.1} parent=5 // pred_fallthru
        _
    $region6: #{tpu_custom_call.1} parent=1 // loop_footer
      %s27 = sadd.s32 1, %s23
    $region7: #{tpu_custom_call.1} parent=1 // loop_footer_branch
      %22 = sbr.rel target = $region3
    $region8: #{tpu_custom_call.1} parent=1 // loop_exit
      _
    %625 = vsyncpa [#allocation4], 1
    %s626 = scalar_lea.sflag [#allocation4], 1
    %627 = vsyncpa %s626, 1
    %628 = vsyncpa [#allocation7], 1
    %s629 = scalar_lea.sflag [#allocation7], 1
    %630 = vsyncpa %s629, 1
    %631 = vsyncpa [#allocation10], 1
    %s632 = scalar_lea.sflag [#allocation10], 1
    %633 = vsyncpa %s632, 1
    %634 = vsyncpa [#allocation5], 1
    %s635 = scalar_lea.sflag [#allocation5], 1
    %636 = vsyncpa %s635, 1

</llo_original>
